<compile_context>
chip_gen: v7x
topology: tpu7x:2x2x1
jax: 0.10.0
libtpu: 0.0.40
codegen_flags: <defaults>
</compile_context>

<pallas_src>
import functools

import jax
import jax.numpy as jnp
from jax.experimental import pallas as pl
from jax.experimental.pallas import tpu as pltpu


def _round_up(x, m):
    return ((x + m - 1) // m) * m


def _pick_tm(n, cap=512):
    """Row tile: multiple of 8, <= cap, minimizing padded-row waste.

    Prefers >= 2 grid steps when the problem is big enough so the single
    'parallel' grid axis can shard across both TensorCores on v7x.
    """
    n8 = _round_up(max(n, 1), 8)
    if n8 <= cap:
        if n8 >= 256 and n8 % 16 == 0:
            return n8 // 2                  # two grid steps for megacore
        return n8                           # one tile covers everything
    best_t, best_w = cap, None
    for t in range(cap, 127, -8):           # multiples of 8, largest first
        w = _round_up(n8, t) - n8
        if best_w is None or w < best_w:
            best_t, best_w = t, w
        if w == 0:
            break
    return best_t


def _char_cnn_highway_kernel(ids_ref, m0_ref, m1_ref, bconv_ref,
                             wpg_ref, bproj_ref, bgate_ref, out_ref,
                             *, lp, n_valid):
    # ids_ref:  (tm, 2*lp) int32  -- cols [:lp] = char at slot t, [lp:] = slot t+1
    # m0_ref/m1_ref: (VP, EP) bf16 -- folded emb @ W_tap0, emb @ W_tap1 (padded)
    # bconv_ref: (1, EP) f32
    # wpg_ref:  (EP, 2*EP) bf16   -- fused [W_proj | W_gate], padded
    # bproj_ref/bgate_ref: (1, EP) f32
    # out_ref:  (tm, EP) f32
    tm = ids_ref.shape[0]
    vp, ep = m0_ref.shape

    ids = ids_ref[...]                                   # (tm, 2*lp)
    ids0 = ids[:, :lp]                                   # char at window slot t
    ids1 = ids[:, lp:]                                   # char at window slot t+1

    # Per-tap one-hot over the (padded) char vocab: non-materialized lane iota,
    # compare broadcasts over rows, bool -> bf16 directly (single VPU pass).
    lane = jax.lax.broadcasted_iota(jnp.int32, (1, 1, vp), 2)
    oh0 = (ids0[:, :, None] == lane).astype(m0_ref.dtype).reshape(tm * lp, vp)
    oh1 = (ids1[:, :, None] == lane).astype(m1_ref.dtype).reshape(tm * lp, vp)

    # Embedding lookup + Conv1d(k=2) fused into two K=128 bf16 MXU matmuls
    # accumulated in f32 (exact same math as gather -> conv).
    y = jnp.dot(oh0, m0_ref[...], preferred_element_type=jnp.float32)
    y = y + jnp.dot(oh1, m1_ref[...], preferred_element_type=jnp.float32)
    conv = jnp.maximum(y + bconv_ref[...], 0.0)          # (tm*lp, ep)

    # Max-over-time; zero window slots past the valid range (post-ReLU values
    # are >= 0, so masking with 0 is exact).
    conv3 = conv.reshape(tm, lp, ep)
    t_idx = jax.lax.broadcasted_iota(jnp.int32, (1, lp, ep), 1)
    h = jnp.max(jnp.where(t_idx < n_valid, conv3, 0.0), axis=1)   # (tm, ep) f32

    # Highway: fused [proj|gate] bf16 matmul, split at the 128-lane boundary.
    hw = jnp.dot(h.astype(wpg_ref.dtype), wpg_ref[...],
                 preferred_element_type=jnp.float32)     # (tm, 2*ep)
    proj = jnp.maximum(hw[:, :ep] + bproj_ref[...], 0.0)
    gate = jax.nn.sigmoid(hw[:, ep:] + bgate_ref[...])
    out_ref[...] = (h + gate * (proj - h)).astype(out_ref.dtype)


def model_embeddings_forward(ids, params, *, tm=None):
    """ids: (seq_len, batch, max_word_length) int32 -> (seq_len, batch, E) f32.

    NOTE: char ids are assumed to lie in [0, vocab_size); out-of-range ids
    silently map to an all-zero embedding row (no error is raised).
    """
    S, B, L = ids.shape
    emb = params['embedding']                    # (V, C) f32
    V, C = emb.shape
    E = params['b_conv'].shape[-1]
    assert L >= 2 and E <= 128                   # char-CNN word embed sizes

    EP = 128                                     # padded feature lanes
    LP = _round_up(L, 8)                         # padded window slots per word
    VP = _round_up(max(V, 1), 128)               # padded char-vocab lanes
    N = S * B

    if tm is None:
        tm = _pick_tm(N)
    tm = max(8, (tm // 8) * 8)
    n_pad = _round_up(N, tm)

    # --- glue: one lane-packed id array holding both conv taps ---
    ids_flat = ids.reshape(N, L).astype(jnp.int32)
    ids_t0 = jnp.pad(ids_flat, ((0, n_pad - N), (0, LP - L)))            # slot t
    ids_t1 = jnp.pad(ids_flat[:, 1:], ((0, n_pad - N), (0, LP - L + 1)))  # slot t+1
    ids_packed = jnp.concatenate([ids_t0, ids_t1], axis=1)               # (n_pad, 2*LP)

    # --- fold the embedding table into the conv weights (exact) ---
    w0 = params['w_conv'][:C]                    # (C, E) tap 0
    w1 = params['w_conv'][C:]                    # (C, E) tap 1
    m0 = jnp.zeros((VP, EP), jnp.float32).at[:V, :E].set(emb @ w0)
    m1 = jnp.zeros((VP, EP), jnp.float32).at[:V, :E].set(emb @ w1)
    m0 = m0.astype(jnp.bfloat16)                 # bf16 MXU path, f32 accumulate
    m1 = m1.astype(jnp.bfloat16)

    bconv = jnp.zeros((1, EP), jnp.float32).at[:, :E].set(
        params['b_conv'].reshape(1, E))
    wpg = jnp.zeros((EP, 2 * EP), jnp.float32)
    wpg = wpg.at[:E, :E].set(params['w_proj']).at[:E, EP:EP + E].set(
        params['w_gate'])
    wpg = wpg.astype(jnp.bfloat16)               # native bf16 MXU matmul
    bproj = jnp.zeros((1, EP), jnp.float32).at[:, :E].set(
        params['b_proj'].reshape(1, E))
    bgate = jnp.zeros((1, EP), jnp.float32).at[:, :E].set(
        params['b_gate'].reshape(1, E))

    kernel = functools.partial(_char_cnn_highway_kernel, lp=LP, n_valid=L - 1)

    cost = pl.CostEstimate(
        flops=2 * (n_pad * LP) * VP * EP * 2 + 2 * n_pad * EP * (2 * EP),
        transcendentals=n_pad * EP,
        bytes_accessed=(n_pad * 128 * 4                  # lane-padded id DMA
                        + 2 * VP * EP * 2 + EP * 2 * EP * 2 + 3 * EP * 4
                        + n_pad * EP * 4),
    )

    out = pl.pallas_call(
        kernel,
        out_shape=jax.ShapeDtypeStruct((n_pad, EP), jnp.float32),
        grid_spec=pltpu.PrefetchScalarGridSpec(
            num_scalar_prefetch=0,
            grid=(n_pad // tm,),
            in_specs=[
                pl.BlockSpec((tm, 2 * LP), lambda i: (i, 0)),   # packed char ids
                pl.BlockSpec((VP, EP), lambda i: (0, 0)),       # folded conv W tap0
                pl.BlockSpec((VP, EP), lambda i: (0, 0)),       # folded conv W tap1
                pl.BlockSpec((1, EP), lambda i: (0, 0)),        # conv bias
                pl.BlockSpec((EP, 2 * EP), lambda i: (0, 0)),   # highway [proj|gate]
                pl.BlockSpec((1, EP), lambda i: (0, 0)),        # proj bias
                pl.BlockSpec((1, EP), lambda i: (0, 0)),        # gate bias
            ],
            out_specs=pl.BlockSpec((tm, EP), lambda i: (i, 0)),
        ),
        compiler_params=pltpu.CompilerParams(
            dimension_semantics=("parallel",),
            vmem_limit_bytes=32 * 1024 * 1024),
        cost_estimate=cost,
    )(ids_packed, m0, m1, bconv, wpg, bproj, bgate)

    # TODO(synk): dropout(p=0.3) is treated as eval-mode identity (torch RNG
    # stream is not reproducible); training-mode masking is omitted.
    return out[:N, :E].reshape(S, B, E)


def make_params(key, vocab_size, char_embed_size, word_embed_size, pad_idx):
    k = jax.random.split(key, 7)
    C, E = char_embed_size, word_embed_size
    emb = jax.random.normal(k[0], (vocab_size, C), jnp.float32) * 0.1
    emb = emb.at[pad_idx].set(0.0)               # padding_idx row = 0
    # Conv1d weight in torch is (E, C, K); pre-pack to (K*C, E) so that
    # row (k*C + c) multiplies the c-th channel of the k-th tap.
    w_conv_t = jax.random.normal(k[1], (E, C, 2), jnp.float32) * 0.1
    w_conv = jnp.transpose(w_conv_t, (2, 1, 0)).reshape(2 * C, E)
    b_conv = jax.random.normal(k[2], (1, E), jnp.float32) * 0.1
    w_proj = jax.random.normal(k[3], (E, E), jnp.float32) * 0.1   # (in, out)
    b_proj = jax.random.normal(k[4], (1, E), jnp.float32) * 0.1
    w_gate = jax.random.normal(k[5], (E, E), jnp.float32) * 0.1
    b_gate = jax.random.normal(k[6], (1, E), jnp.float32) * 0.1
    return dict(embedding=emb, w_conv=w_conv, b_conv=b_conv,
                w_proj=w_proj, b_proj=b_proj, w_gate=w_gate, b_gate=b_gate)


def reference_forward(ids, params):
    """Pure-JAX f32 reference of the same forward, for correctness checking."""
    S, B, L = ids.shape
    C = params['embedding'].shape[1]
    E = params['b_conv'].shape[-1]
    x = jnp.take(params['embedding'], ids.reshape(-1), axis=0).reshape(S * B, L, C)
    xwin = jnp.concatenate([x[:, :-1, :], x[:, 1:, :]], axis=-1)
    conv = jnp.maximum(jnp.einsum('ntk,ke->nte', xwin, params['w_conv'])
                       + params['b_conv'][None], 0.0)
    h = jnp.max(conv, axis=1)
    proj = jnp.maximum(h @ params['w_proj'] + params['b_proj'], 0.0)
    gate = jax.nn.sigmoid(h @ params['w_gate'] + params['b_gate'])
    out = gate * proj + (1.0 - gate) * h
    return out.reshape(S, B, E)


if __name__ == "__main__":
    key = jax.random.PRNGKey(0)
    vocab_size = 30
    pad_idx = 0
    char_embed_size = 50          # fixed by the module
    word_embed_size = 32          # E
    seq_len, batch, max_word_len = 8, 2, 8

    kp, ki = jax.random.split(key)
    params = make_params(kp, vocab_size, char_embed_size, word_embed_size, pad_idx)
    ids = jax.random.randint(ki, (seq_len, batch, max_word_len), 0, vocab_size,
                             dtype=jnp.int32)

    out = model_embeddings_forward(ids, params)
    out = jax.block_until_ready(out)

    ref = reference_forward(ids, params)
    assert out.shape == (seq_len, batch, word_embed_size)
    # bf16-quantized folded conv + highway weights -> tolerance ~2e-2 vs f32 ref.
    err = float(jnp.max(jnp.abs(out - ref)))
    assert jnp.allclose(out, ref, atol=2e-2, rtol=2e-2), err
    print("KERNEL_OK")
</pallas_src>

<mosaic_0001>
module attributes {stable_mosaic.version = 11 : i64} {
  func.func @_char_cnn_highway_kernel(%arg0: i32, %arg1: memref<16x16xi32, #tpu.memory_space<vmem>>, %arg2: memref<128x128xbf16, #tpu.memory_space<vmem>>, %arg3: memref<128x128xbf16, #tpu.memory_space<vmem>>, %arg4: memref<1x128xf32, #tpu.memory_space<vmem>>, %arg5: memref<128x256xbf16, #tpu.memory_space<vmem>>, %arg6: memref<1x128xf32, #tpu.memory_space<vmem>>, %arg7: memref<1x128xf32, #tpu.memory_space<vmem>>, %arg8: memref<16x128xf32, #tpu.memory_space<vmem>>) attributes {dimension_semantics = [#tpu.dimension_semantics<parallel>], iteration_bounds = array<i64: 1>, scalar_prefetch = 0 : i64, scratch_operands = 0 : i64, tpu.core_type = #tpu.core_type<tc>, window_params = [{transform_indices = @transform_0, window_bounds = array<i64: 16, 16>}, {pipeline_mode = #tpu.pipeline_mode<synchronous>, transform_indices = @transform_1, window_bounds = array<i64: 128, 128>}, {pipeline_mode = #tpu.pipeline_mode<synchronous>, transform_indices = @transform_2, window_bounds = array<i64: 128, 128>}, {pipeline_mode = #tpu.pipeline_mode<synchronous>, transform_indices = @transform_3, window_bounds = array<i64: 1, 128>}, {pipeline_mode = #tpu.pipeline_mode<synchronous>, transform_indices = @transform_4, window_bounds = array<i64: 128, 256>}, {pipeline_mode = #tpu.pipeline_mode<synchronous>, transform_indices = @transform_5, window_bounds = array<i64: 1, 128>}, {pipeline_mode = #tpu.pipeline_mode<synchronous>, transform_indices = @transform_6, window_bounds = array<i64: 1, 128>}, {transform_indices = @transform_7, window_bounds = array<i64: 16, 128>}]} {
    %c0 = arith.constant 0 : index
    %c0_0 = arith.constant 0 : index
    %0 = vector.load %arg1[%c0, %c0_0] : memref<16x16xi32, #tpu.memory_space<vmem>>, vector<16x16xi32>
    %1 = vector.extract_strided_slice %0 {offsets = [0, 0], sizes = [16, 8], strides = [1, 1]} : vector<16x16xi32> to vector<16x8xi32>
    %2 = vector.extract_strided_slice %0 {offsets = [0, 8], sizes = [16, 8], strides = [1, 1]} : vector<16x16xi32> to vector<16x8xi32>
    %3 = tpu.iota {dimensions = array<i32: 2>} : vector<1x1x128xi32>
    %4 = vector.shape_cast %1 : vector<16x8xi32> to vector<16x8x1xi32>
    %5 = vector.broadcast %4 : vector<16x8x1xi32> to vector<16x8x128xi32>
    %6 = vector.broadcast %3 : vector<1x1x128xi32> to vector<16x8x128xi32>
    %7 = arith.cmpi eq, %5, %6 : vector<16x8x128xi32>
    %8 = arith.extui %7 : vector<16x8x128xi1> to vector<16x8x128xi32>
    %9 = arith.sitofp %8 : vector<16x8x128xi32> to vector<16x8x128xf32>
    %10 = arith.truncf %9 : vector<16x8x128xf32> to vector<16x8x128xbf16>
    %11 = vector.shape_cast %10 : vector<16x8x128xbf16> to vector<128x128xbf16>
    %12 = vector.shape_cast %2 : vector<16x8xi32> to vector<16x8x1xi32>
    %13 = vector.broadcast %12 : vector<16x8x1xi32> to vector<16x8x128xi32>
    %14 = vector.broadcast %3 : vector<1x1x128xi32> to vector<16x8x128xi32>
    %15 = arith.cmpi eq, %13, %14 : vector<16x8x128xi32>
    %16 = arith.extui %15 : vector<16x8x128xi1> to vector<16x8x128xi32>
    %17 = arith.sitofp %16 : vector<16x8x128xi32> to vector<16x8x128xf32>
    %18 = arith.truncf %17 : vector<16x8x128xf32> to vector<16x8x128xbf16>
    %19 = vector.shape_cast %18 : vector<16x8x128xbf16> to vector<128x128xbf16>
    %c0_1 = arith.constant 0 : index
    %c0_2 = arith.constant 0 : index
    %20 = vector.load %arg2[%c0_1, %c0_2] : memref<128x128xbf16, #tpu.memory_space<vmem>>, vector<128x128xbf16>
    %cst = arith.constant dense<0.000000e+00> : vector<128x128xf32>
    %21 = tpu.matmul %11, %20, %cst {dimension_numbers = #tpu.dot_dimension_numbers<[1], [0], [0], [1], [0, 0, 1, 1], [], []>} : vector<128x128xbf16>, vector<128x128xbf16>, vector<128x128xf32> -> vector<128x128xf32>
    %c0_3 = arith.constant 0 : index
    %c0_4 = arith.constant 0 : index
    %22 = vector.load %arg3[%c0_3, %c0_4] : memref<128x128xbf16, #tpu.memory_space<vmem>>, vector<128x128xbf16>
    %cst_5 = arith.constant dense<0.000000e+00> : vector<128x128xf32>
    %23 = tpu.matmul %19, %22, %cst_5 {dimension_numbers = #tpu.dot_dimension_numbers<[1], [0], [0], [1], [0, 0, 1, 1], [], []>} : vector<128x128xbf16>, vector<128x128xbf16>, vector<128x128xf32> -> vector<128x128xf32>
    %24 = arith.addf %21, %23 : vector<128x128xf32>
    %c0_6 = arith.constant 0 : index
    %c0_7 = arith.constant 0 : index
    %25 = vector.load %arg4[%c0_6, %c0_7] : memref<1x128xf32, #tpu.memory_space<vmem>>, vector<1x128xf32>
    %26 = vector.broadcast %25 : vector<1x128xf32> to vector<128x128xf32>
    %27 = arith.addf %24, %26 : vector<128x128xf32>
    %cst_8 = arith.constant 0.000000e+00 : f32
    %28 = vector.broadcast %cst_8 : f32 to vector<128x128xf32>
    %29 = arith.maximumf %27, %28 : vector<128x128xf32>
    %30 = vector.shape_cast %29 : vector<128x128xf32> to vector<16x8x128xf32>
    %31 = tpu.iota {dimensions = array<i32: 1>} : vector<1x8x128xi32>
    %c7_i32 = arith.constant 7 : i32
    %32 = vector.broadcast %c7_i32 : i32 to vector<1x8x128xi32>
    %33 = arith.cmpi slt, %31, %32 : vector<1x8x128xi32>
    %cst_9 = arith.constant 0.000000e+00 : f32
    %34 = vector.shape_cast %33 : vector<1x8x128xi1> to vector<1x8x128xi1>
    %35 = vector.broadcast %34 : vector<1x8x128xi1> to vector<16x8x128xi1>
    %36 = vector.broadcast %cst_9 : f32 to vector<16x8x128xf32>
    %37 = arith.select %35, %30, %36 : vector<16x8x128xi1>, vector<16x8x128xf32>
    %cst_10 = arith.constant dense<0xFF800000> : vector<16x128xf32>
    %38 = vector.multi_reduction <maximumf>, %37, %cst_10 [1] : vector<16x8x128xf32> to vector<16x128xf32>
    %39 = arith.truncf %38 : vector<16x128xf32> to vector<16x128xbf16>
    %c0_11 = arith.constant 0 : index
    %c0_12 = arith.constant 0 : index
    %40 = vector.load %arg5[%c0_11, %c0_12] : memref<128x256xbf16, #tpu.memory_space<vmem>>, vector<128x256xbf16>
    %cst_13 = arith.constant dense<0.000000e+00> : vector<16x256xf32>
    %41 = tpu.matmul %39, %40, %cst_13 {dimension_numbers = #tpu.dot_dimension_numbers<[1], [0], [0], [1], [0, 0, 1, 1], [], []>} : vector<16x128xbf16>, vector<128x256xbf16>, vector<16x256xf32> -> vector<16x256xf32>
    %42 = vector.extract_strided_slice %41 {offsets = [0, 0], sizes = [16, 128], strides = [1, 1]} : vector<16x256xf32> to vector<16x128xf32>
    %c0_14 = arith.constant 0 : index
    %c0_15 = arith.constant 0 : index
    %43 = vector.load %arg6[%c0_14, %c0_15] : memref<1x128xf32, #tpu.memory_space<vmem>>, vector<1x128xf32>
    %44 = vector.broadcast %43 : vector<1x128xf32> to vector<16x128xf32>
    %45 = arith.addf %42, %44 : vector<16x128xf32>
    %cst_16 = arith.constant 0.000000e+00 : f32
    %46 = vector.broadcast %cst_16 : f32 to vector<16x128xf32>
    %47 = arith.maximumf %45, %46 : vector<16x128xf32>
    %48 = vector.extract_strided_slice %41 {offsets = [0, 128], sizes = [16, 128], strides = [1, 1]} : vector<16x256xf32> to vector<16x128xf32>
    %c0_17 = arith.constant 0 : index
    %c0_18 = arith.constant 0 : index
    %49 = vector.load %arg7[%c0_17, %c0_18] : memref<1x128xf32, #tpu.memory_space<vmem>>, vector<1x128xf32>
    %50 = vector.broadcast %49 : vector<1x128xf32> to vector<16x128xf32>
    %51 = arith.addf %48, %50 : vector<16x128xf32>
    %52 = arith.negf %51 : vector<16x128xf32>
    %53 = math.exp %52 : vector<16x128xf32>
    %cst_19 = arith.constant 1.000000e+00 : f32
    %54 = vector.broadcast %cst_19 : f32 to vector<16x128xf32>
    %55 = arith.addf %54, %53 : vector<16x128xf32>
    %56 = arith.divf %54, %55 : vector<16x128xf32>
    %57 = arith.subf %47, %38 : vector<16x128xf32>
    %58 = arith.mulf %56, %57 : vector<16x128xf32>
    %59 = arith.addf %38, %58 : vector<16x128xf32>
    %c0_20 = arith.constant 0 : index
    %c0_21 = arith.constant 0 : index
    %60 = vector.load %arg8[%c0_20, %c0_21] : memref<16x128xf32, #tpu.memory_space<vmem>>, vector<16x128xf32>
    tpu.vector_store %arg8[%c0_20, %c0_21], %59 {strides = array<i32>} : memref<16x128xf32, #tpu.memory_space<vmem>>, vector<16x128xf32>,
    return
  }
  func.func @transform_0(%arg0: i32) -> (i32, i32) {
    %c0_i32 = arith.constant 0 : i32
    %c0_i32_0 = arith.constant 0 : i32
    return %arg0, %c0_i32 : i32, i32
  }
  func.func @transform_1(%arg0: i32) -> (i32, i32) {
    %c0_i32 = arith.constant 0 : i32
    %c0_i32_0 = arith.constant 0 : i32
    %c0_i32_1 = arith.constant 0 : i32
    return %c0_i32, %c0_i32_0 : i32, i32
  }
  func.func @transform_2(%arg0: i32) -> (i32, i32) {
    %c0_i32 = arith.constant 0 : i32
    %c0_i32_0 = arith.constant 0 : i32
    %c0_i32_1 = arith.constant 0 : i32
    return %c0_i32, %c0_i32_0 : i32, i32
  }
  func.func @transform_3(%arg0: i32) -> (i32, i32) {
    %c0_i32 = arith.constant 0 : i32
    %c0_i32_0 = arith.constant 0 : i32
    %c0_i32_1 = arith.constant 0 : i32
    return %c0_i32, %c0_i32_0 : i32, i32
  }
  func.func @transform_4(%arg0: i32) -> (i32, i32) {
    %c0_i32 = arith.constant 0 : i32
    %c0_i32_0 = arith.constant 0 : i32
    %c0_i32_1 = arith.constant 0 : i32
    return %c0_i32, %c0_i32_0 : i32, i32
  }
  func.func @transform_5(%arg0: i32) -> (i32, i32) {
    %c0_i32 = arith.constant 0 : i32
    %c0_i32_0 = arith.constant 0 : i32
    %c0_i32_1 = arith.constant 0 : i32
    return %c0_i32, %c0_i32_0 : i32, i32
  }
  func.func @transform_6(%arg0: i32) -> (i32, i32) {
    %c0_i32 = arith.constant 0 : i32
    %c0_i32_0 = arith.constant 0 : i32
    %c0_i32_1 = arith.constant 0 : i32
    return %c0_i32, %c0_i32_0 : i32, i32
  }
  func.func @transform_7(%arg0: i32) -> (i32, i32) {
    %c0_i32 = arith.constant 0 : i32
    %c0_i32_0 = arith.constant 0 : i32
    return %arg0, %c0_i32 : i32, i32
  }
}

</mosaic_0001>

<llo_original>
// kernel: tpu_custom_call.1
$region0: #{tpu_custom_call.1}
  #allocation0 [shape = 'u32[]', space=smem, size = 0x4, offset = 0x4, fixed_abs, tag = 'smem constant byte address 0x4 - core index']
  #allocation1 [shape = 'u32[144,128]{1,0:T(1,128)}', space=vmem, size = 0x12000, scoped, tag = 'internal scratch']
  %s0 = inlined_call_operand.hbm [shape: s32[16,16], index: 0, kind: input, shape index: {}]
  %s1 = inlined_call_operand.hbm [shape: bf16[128,128], index: 1, kind: input, shape index: {}]
  %s2 = inlined_call_operand.hbm [shape: bf16[128,128], index: 2, kind: input, shape index: {}]
  %s3 = inlined_call_operand.vmem [shape: f32[1,128], index: 3, kind: input, shape index: {}]
  %s4 = inlined_call_operand.hbm [shape: bf16[128,256], index: 4, kind: input, shape index: {}]
  %s5 = inlined_call_operand.vmem [shape: f32[1,128], index: 5, kind: input, shape index: {}]
  %s6 = inlined_call_operand.vmem [shape: f32[1,128], index: 6, kind: input, shape index: {}]
  %s7 = inlined_call_operand.hbm [shape: f32[16,128], index: 7, kind: output, shape index: {}]
  %s8 = sld [smem:[#allocation0]]
  $region54: #{tpu_custom_call.1} parent=0
    _
  %s10 = ssub.s32 1, %s8
  %s11 = scalar_select 0, %s10, %s8
  $region1: #{tpu_custom_call.1} parent=0
    #allocation2 [shape = 'u8[8192]{0}', space=vmem, size = 0x2000, scoped, tag = 'input window, operand 0, single buffered']
    #allocation3 [shape = 's32[1]{0}', space=sflag, size = 0x4, scoped, tag = 'scoped memory for tpu_custom_call.1']
    #allocation4 [shape = 's32[1]{0}', space=sflag, size = 0x4, scoped, tag = 'scoped memory for tpu_custom_call.1']
    #allocation5 [shape = 'u8[32768]{0}', space=vmem, size = 0x8000, scoped, tag = 'input window, operand 1, single buffered']
    #allocation6 [shape = 's32[1]{0}', space=sflag, size = 0x4, scoped, tag = 'scoped memory for tpu_custom_call.1']
    #allocation7 [shape = 'u8[32768]{0}', space=vmem, size = 0x8000, scoped, tag = 'input window, operand 2, single buffered']
    #allocation8 [shape = 'u8[65536]{0}', space=vmem, size = 0x10000, scoped, tag = 'input window, operand 4, single buffered']
    #allocation9 [shape = 's32[1]{0}', space=sflag, size = 0x4, scoped, tag = 'scoped memory for tpu_custom_call.1']
    #allocation10 [shape = 'u8[8192]{0}', space=vmem, size = 0x2000, scoped, tag = 'output window, operand 0, single buffered']
    %12 = vsyncpa [#allocation3], 0
    %13 = vsyncpa [#allocation6], 0
    %14 = vsyncpa [#allocation9], 0
    %15 = vsyncpa [#allocation4], 0
    // Predicated region
    $region2: #{tpu_custom_call.1} parent=1 // pred_check
      _
    $region3: #{tpu_custom_call.1} parent=1 // pred_check_branch
      %17 = sbr.rel (0) target = $region5
    $region4: #{tpu_custom_call.1} parent=1 // pred_region
      %s19 = ssub.s32 256, 256
      %20 = vsyncadd [#allocation3], %s19
      %s21 = sshll.u32 [#allocation2], 4
      %s22 = int_to_ptr.vmem [resolvable:$true] %s21
      %27 = dma.hbm_to_vmem [thread:$0]  %s0, 256, %s22, [#allocation3], 128, 128, 8
    $region5: #{tpu_custom_call.1} parent=1 // pred_fallthru
      _
    // Predicated region
    $region6: #{tpu_custom_call.1} parent=1 // pred_check
      _
    $region7: #{tpu_custom_call.1} parent=1 // pred_check_branch
      %29 = sbr.rel (0) target = $region9
    $region8: #{tpu_custom_call.1} parent=1 // pred_region
      %s31 = ssub.s32 1024, 1024
      %32 = vsyncadd [#allocation6], %s31
      %s33 = sshll.u32 [#allocation5], 4
      %s34 = int_to_ptr.vmem [resolvable:$true] %s33
      %39 = dma.hbm_to_vmem [thread:$0]  %s1, 1024, %s34, [#allocation6], 64, 64, 4
    $region9: #{tpu_custom_call.1} parent=1 // pred_fallthru
      _
    // Predicated region
    $region10: #{tpu_custom_call.1} parent=1 // pred_check
      _
    $region11: #{tpu_custom_call.1} parent=1 // pred_check_branch
      %41 = sbr.rel (0) target = $region13
    $region12: #{tpu_custom_call.1} parent=1 // pred_region
      %s43 = ssub.s32 1024, 1024
      %44 = vsyncadd [#allocation6], %s43
      %s45 = sshll.u32 [#allocation7], 4
      %s46 = int_to_ptr.vmem [resolvable:$true] %s45
      %51 = dma.hbm_to_vmem [thread:$0]  %s2, 1024, %s46, [#allocation6], 64, 64, 4
    $region13: #{tpu_custom_call.1} parent=1 // pred_fallthru
      _
    // Predicated region
    $region14: #{tpu_custom_call.1} parent=1 // pred_check
      _
    $region15: #{tpu_custom_call.1} parent=1 // pred_check_branch
      %53 = sbr.rel (0) target = $region17
    $region16: #{tpu_custom_call.1} parent=1 // pred_region
      _
    $region17: #{tpu_custom_call.1} parent=1 // pred_fallthru
      _
    // Predicated region
    $region18: #{tpu_custom_call.1} parent=1 // pred_check
      _
    $region19: #{tpu_custom_call.1} parent=1 // pred_check_branch
      %55 = sbr.rel (0) target = $region21
    $region20: #{tpu_custom_call.1} parent=1 // pred_region
      %s57 = ssub.s32 2048, 2048
      %58 = vsyncadd [#allocation9], %s57
      %s59 = sshll.u32 [#allocation8], 4
      %s60 = int_to_ptr.vmem [resolvable:$true] %s59
      %65 = dma.hbm_to_vmem [thread:$0]  %s4, 2048, %s60, [#allocation9], 128, 128, 8
    $region21: #{tpu_custom_call.1} parent=1 // pred_fallthru
      _
    // Predicated region
    $region22: #{tpu_custom_call.1} parent=1 // pred_check
      _
    $region23: #{tpu_custom_call.1} parent=1 // pred_check_branch
      %67 = sbr.rel (0) target = $region25
    $region24: #{tpu_custom_call.1} parent=1 // pred_region
      _
    $region25: #{tpu_custom_call.1} parent=1 // pred_fallthru
      _
    // Predicated region
    $region26: #{tpu_custom_call.1} parent=1 // pred_check
      _
    $region27: #{tpu_custom_call.1} parent=1 // pred_check_branch
      %69 = sbr.rel (0) target = $region29
    $region28: #{tpu_custom_call.1} parent=1 // pred_region
      _
    $region29: #{tpu_custom_call.1} parent=1 // pred_fallthru
      _
    // Predicated region
    $region30: #{tpu_custom_call.1} parent=1 // pred_check
      _
    $region31: #{tpu_custom_call.1} parent=1 // pred_check_branch
      %71 = sbr.rel (0) target = $region33
    $region32: #{tpu_custom_call.1} parent=1 // pred_region
      %72 = dma.done [#allocation3], 256
    $region33: #{tpu_custom_call.1} parent=1 // pred_fallthru
      _
    // Predicated region
    $region34: #{tpu_custom_call.1} parent=1 // pred_check
      _
    $region35: #{tpu_custom_call.1} parent=1 // pred_check_branch
      %74 = sbr.rel (0) target = $region37
    $region36: #{tpu_custom_call.1} parent=1 // pred_region
      %75 = dma.done [#allocation6], 1024
    $region37: #{tpu_custom_call.1} parent=1 // pred_fallthru
      _
    // Predicated region
    $region38: #{tpu_custom_call.1} parent=1 // pred_check
      _
    $region39: #{tpu_custom_call.1} parent=1 // pred_check_branch
      %77 = sbr.rel (0) target = $region41
    $region40: #{tpu_custom_call.1} parent=1 // pred_region
      %78 = dma.done [#allocation6], 1024
    $region41: #{tpu_custom_call.1} parent=1 // pred_fallthru
      _
    // Predicated region
    $region42: #{tpu_custom_call.1} parent=1 // pred_check
      _
    $region43: #{tpu_custom_call.1} parent=1 // pred_check_branch
      %80 = sbr.rel (0) target = $region45
    $region44: #{tpu_custom_call.1} parent=1 // pred_region
      %81 = dma.done [#allocation9], 2048
    $region45: #{tpu_custom_call.1} parent=1 // pred_fallthru
      _
    %v83 = vld [vmem:[#allocation2] sm:$0xff]
    %v84 = vld [vmem:[#allocation2 + $0x8] sm:$0xff]
    %v85 = vlaneseq
    %v86 = vand.u32 %v85, 127
    %v87 = vlaneseq
    %v88 = vshrl.u32 %v87, 7
    %v89 = vsub.s32 0, %v88
    %v90 = vrot.slane %v83, %v89
    %92 = vbcast.lane.b32.xlu0 %v90, 256
    %v93 = vpop.permute.xlu0 %92
    %v94 = vlaneseq
    %v95 = vshrl.u32 %v94, 7
    %v96 = vsub.s32 1, %v95
    %v97 = vrot.slane %v83, %v96
    %99 = vbcast.lane.b32.xlu0 %v97, 256
    %v100 = vpop.permute.xlu0 %99
    %v101 = vlaneseq
    %v102 = vshrl.u32 %v101, 7
    %v103 = vsub.s32 2, %v102
    %v104 = vrot.slane %v83, %v103
    %106 = vbcast.lane.b32.xlu0 %v104, 256
    %v107 = vpop.permute.xlu0 %106
    %v108 = vlaneseq
    %v109 = vshrl.u32 %v108, 7
    %v110 = vsub.s32 3, %v109
    %v111 = vrot.slane %v83, %v110
    %113 = vbcast.lane.b32.xlu0 %v111, 256
    %v114 = vpop.permute.xlu0 %113
    %v115 = vlaneseq
    %v116 = vshrl.u32 %v115, 7
    %v117 = vsub.s32 4, %v116
    %v118 = vrot.slane %v83, %v117
    %120 = vbcast.lane.b32.xlu0 %v118, 256
    %v121 = vpop.permute.xlu0 %120
    %v122 = vlaneseq
    %v123 = vshrl.u32 %v122, 7
    %v124 = vsub.s32 5, %v123
    %v125 = vrot.slane %v83, %v124
    %127 = vbcast.lane.b32.xlu0 %v125, 256
    %v128 = vpop.permute.xlu0 %127
    %v129 = vlaneseq
    %v130 = vshrl.u32 %v129, 7
    %v131 = vsub.s32 6, %v130
    %v132 = vrot.slane %v83, %v131
    %134 = vbcast.lane.b32.xlu0 %v132, 256
    %v135 = vpop.permute.xlu0 %134
    %v136 = vlaneseq
    %v137 = vshrl.u32 %v136, 7
    %v138 = vsub.s32 7, %v137
    %v139 = vrot.slane %v83, %v138
    %141 = vbcast.lane.b32.xlu0 %v139, 256
    %v142 = vpop.permute.xlu0 %141
    %v143 = vlaneseq
    %v144 = vshrl.u32 %v143, 7
    %v145 = vsub.s32 0, %v144
    %v146 = vrot.slane %v84, %v145
    %148 = vbcast.lane.b32.xlu0 %v146, 256
    %v149 = vpop.permute.xlu0 %148
    %v150 = vlaneseq
    %v151 = vshrl.u32 %v150, 7
    %v152 = vsub.s32 1, %v151
    %v153 = vrot.slane %v84, %v152
    %155 = vbcast.lane.b32.xlu0 %v153, 256
    %v156 = vpop.permute.xlu0 %155
    %v157 = vlaneseq
    %v158 = vshrl.u32 %v157, 7
    %v159 = vsub.s32 2, %v158
    %v160 = vrot.slane %v84, %v159
    %162 = vbcast.lane.b32.xlu0 %v160, 256
    %v163 = vpop.permute.xlu0 %162
    %v164 = vlaneseq
    %v165 = vshrl.u32 %v164, 7
    %v166 = vsub.s32 3, %v165
    %v167 = vrot.slane %v84, %v166
    %169 = vbcast.lane.b32.xlu0 %v167, 256
    %v170 = vpop.permute.xlu0 %169
    %v171 = vlaneseq
    %v172 = vshrl.u32 %v171, 7
    %v173 = vsub.s32 4, %v172
    %v174 = vrot.slane %v84, %v173
    %176 = vbcast.lane.b32.xlu0 %v174, 256
    %v177 = vpop.permute.xlu0 %176
    %v178 = vlaneseq
    %v179 = vshrl.u32 %v178, 7
    %v180 = vsub.s32 5, %v179
    %v181 = vrot.slane %v84, %v180
    %183 = vbcast.lane.b32.xlu0 %v181, 256
    %v184 = vpop.permute.xlu0 %183
    %v185 = vlaneseq
    %v186 = vshrl.u32 %v185, 7
    %v187 = vsub.s32 6, %v186
    %v188 = vrot.slane %v84, %v187
    %190 = vbcast.lane.b32.xlu0 %v188, 256
    %v191 = vpop.permute.xlu0 %190
    %v192 = vlaneseq
    %v193 = vshrl.u32 %v192, 7
    %v194 = vsub.s32 7, %v193
    %v195 = vrot.slane %v84, %v194
    %197 = vbcast.lane.b32.xlu0 %v195, 256
    %v198 = vpop.permute.xlu0 %197
    %vm199 = vcmp.eq.s32.totalorder %v93, %v86
    %vm200 = vcmp.eq.s32.totalorder %v100, %v86
    %vm201 = vcmp.eq.s32.totalorder %v107, %v86
    %vm202 = vcmp.eq.s32.totalorder %v114, %v86
    %vm203 = vcmp.eq.s32.totalorder %v121, %v86
    %vm204 = vcmp.eq.s32.totalorder %v128, %v86
    %vm205 = vcmp.eq.s32.totalorder %v135, %v86
    %vm206 = vcmp.eq.s32.totalorder %v142, %v86
    %vm207 = vcmp.eq.s32.totalorder %v149, %v86
    %vm208 = vcmp.eq.s32.totalorder %v156, %v86
    %vm209 = vcmp.eq.s32.totalorder %v163, %v86
    %vm210 = vcmp.eq.s32.totalorder %v170, %v86
    %vm211 = vcmp.eq.s32.totalorder %v177, %v86
    %vm212 = vcmp.eq.s32.totalorder %v184, %v86
    %vm213 = vcmp.eq.s32.totalorder %v191, %v86
    %vm214 = vcmp.eq.s32.totalorder %v198, %v86
    %v215 = vsel %vm199, 1, 0
    %v216 = vsel %vm200, 1, 0
    %v217 = vsel %vm201, 1, 0
    %v218 = vsel %vm202, 1, 0
    %v219 = vsel %vm203, 1, 0
    %v220 = vsel %vm204, 1, 0
    %v221 = vsel %vm205, 1, 0
    %v222 = vsel %vm206, 1, 0
    %v223 = vsel %vm207, 1, 0
    %v224 = vsel %vm208, 1, 0
    %v225 = vsel %vm209, 1, 0
    %v226 = vsel %vm210, 1, 0
    %v227 = vsel %vm211, 1, 0
    %v228 = vsel %vm212, 1, 0
    %v229 = vsel %vm213, 1, 0
    %v230 = vsel %vm214, 1, 0
    %v231 = vcvt.s32.f32 %v215
    %v232 = vcvt.s32.f32 %v216
    %v233 = vcvt.s32.f32 %v217
    %v234 = vcvt.s32.f32 %v218
    %v235 = vcvt.s32.f32 %v219
    %v236 = vcvt.s32.f32 %v220
    %v237 = vcvt.s32.f32 %v221
    %v238 = vcvt.s32.f32 %v222
    %v239 = vcvt.s32.f32 %v223
    %v240 = vcvt.s32.f32 %v224
    %v241 = vcvt.s32.f32 %v225
    %v242 = vcvt.s32.f32 %v226
    %v243 = vcvt.s32.f32 %v227
    %v244 = vcvt.s32.f32 %v228
    %v245 = vcvt.s32.f32 %v229
    %v246 = vcvt.s32.f32 %v230
    %v247 = vpack.c.bf16 %v231, %v231
    %v248 = vpack.c.bf16 %v232, %v232
    %v249 = vpack.c.bf16 %v233, %v233
    %v250 = vpack.c.bf16 %v234, %v234
    %v251 = vpack.c.bf16 %v235, %v235
    %v252 = vpack.c.bf16 %v236, %v236
    %v253 = vpack.c.bf16 %v237, %v237
    %v254 = vpack.c.bf16 %v238, %v238
    %v255 = vpack.c.bf16 %v239, %v239
    %v256 = vpack.c.bf16 %v240, %v240
    %v257 = vpack.c.bf16 %v241, %v241
    %v258 = vpack.c.bf16 %v242, %v242
    %v259 = vpack.c.bf16 %v243, %v243
    %v260 = vpack.c.bf16 %v244, %v244
    %v261 = vpack.c.bf16 %v245, %v245
    %v262 = vpack.c.bf16 %v246, %v246
    %s264 = sor.u32 256, 8
    %265 = vbcast.lane.b32.xlu0 %v90, %s264
    %v266 = vpop.permute.xlu0 %265
    %s268 = sor.u32 256, 8
    %269 = vbcast.lane.b32.xlu0 %v97, %s268
    %v270 = vpop.permute.xlu0 %269
    %s272 = sor.u32 256, 8
    %273 = vbcast.lane.b32.xlu0 %v104, %s272
    %v274 = vpop.permute.xlu0 %273
    %s276 = sor.u32 256, 8
    %277 = vbcast.lane.b32.xlu0 %v111, %s276
    %v278 = vpop.permute.xlu0 %277
    %s280 = sor.u32 256, 8
    %281 = vbcast.lane.b32.xlu0 %v118, %s280
    %v282 = vpop.permute.xlu0 %281
    %s284 = sor.u32 256, 8
    %285 = vbcast.lane.b32.xlu0 %v125, %s284
    %v286 = vpop.permute.xlu0 %285
    %s288 = sor.u32 256, 8
    %289 = vbcast.lane.b32.xlu0 %v132, %s288
    %v290 = vpop.permute.xlu0 %289
    %s292 = sor.u32 256, 8
    %293 = vbcast.lane.b32.xlu0 %v139, %s292
    %v294 = vpop.permute.xlu0 %293
    %s296 = sor.u32 256, 8
    %297 = vbcast.lane.b32.xlu0 %v146, %s296
    %v298 = vpop.permute.xlu0 %297
    %s300 = sor.u32 256, 8
    %301 = vbcast.lane.b32.xlu0 %v153, %s300
    %v302 = vpop.permute.xlu0 %301
    %s304 = sor.u32 256, 8
    %305 = vbcast.lane.b32.xlu0 %v160, %s304
    %v306 = vpop.permute.xlu0 %305
    %s308 = sor.u32 256, 8
    %309 = vbcast.lane.b32.xlu0 %v167, %s308
    %v310 = vpop.permute.xlu0 %309
    %s312 = sor.u32 256, 8
    %313 = vbcast.lane.b32.xlu0 %v174, %s312
    %v314 = vpop.permute.xlu0 %313
    %s316 = sor.u32 256, 8
    %317 = vbcast.lane.b32.xlu0 %v181, %s316
    %v318 = vpop.permute.xlu0 %317
    %s320 = sor.u32 256, 8
    %321 = vbcast.lane.b32.xlu0 %v188, %s320
    %v322 = vpop.permute.xlu0 %321
    %s324 = sor.u32 256, 8
    %325 = vbcast.lane.b32.xlu0 %v195, %s324
    %v326 = vpop.permute.xlu0 %325
    %vm327 = vcmp.eq.s32.totalorder %v266, %v86
    %vm328 = vcmp.eq.s32.totalorder %v270, %v86
    %vm329 = vcmp.eq.s32.totalorder %v274, %v86
    %vm330 = vcmp.eq.s32.totalorder %v278, %v86
    %vm331 = vcmp.eq.s32.totalorder %v282, %v86
    %vm332 = vcmp.eq.s32.totalorder %v286, %v86
    %vm333 = vcmp.eq.s32.totalorder %v290, %v86
    %vm334 = vcmp.eq.s32.totalorder %v294, %v86
    %vm335 = vcmp.eq.s32.totalorder %v298, %v86
    %vm336 = vcmp.eq.s32.totalorder %v302, %v86
    %vm337 = vcmp.eq.s32.totalorder %v306, %v86
    %vm338 = vcmp.eq.s32.totalorder %v310, %v86
    %vm339 = vcmp.eq.s32.totalorder %v314, %v86
    %vm340 = vcmp.eq.s32.totalorder %v318, %v86
    %vm341 = vcmp.eq.s32.totalorder %v322, %v86
    %vm342 = vcmp.eq.s32.totalorder %v326, %v86
    %v343 = vsel %vm327, 1, 0
    %v344 = vsel %vm328, 1, 0
    %v345 = vsel %vm329, 1, 0
    %v346 = vsel %vm330, 1, 0
    %v347 = vsel %vm331, 1, 0
    %v348 = vsel %vm332, 1, 0
    %v349 = vsel %vm333, 1, 0
    %v350 = vsel %vm334, 1, 0
    %v351 = vsel %vm335, 1, 0
    %v352 = vsel %vm336, 1, 0
    %v353 = vsel %vm337, 1, 0
    %v354 = vsel %vm338, 1, 0
    %v355 = vsel %vm339, 1, 0
    %v356 = vsel %vm340, 1, 0
    %v357 = vsel %vm341, 1, 0
    %v358 = vsel %vm342, 1, 0
    %v359 = vcvt.s32.f32 %v343
    %v360 = vcvt.s32.f32 %v344
    %v361 = vcvt.s32.f32 %v345
    %v362 = vcvt.s32.f32 %v346
    %v363 = vcvt.s32.f32 %v347
    %v364 = vcvt.s32.f32 %v348
    %v365 = vcvt.s32.f32 %v349
    %v366 = vcvt.s32.f32 %v350
    %v367 = vcvt.s32.f32 %v351
    %v368 = vcvt.s32.f32 %v352
    %v369 = vcvt.s32.f32 %v353
    %v370 = vcvt.s32.f32 %v354
    %v371 = vcvt.s32.f32 %v355
    %v372 = vcvt.s32.f32 %v356
    %v373 = vcvt.s32.f32 %v357
    %v374 = vcvt.s32.f32 %v358
    %v375 = vpack.c.bf16 %v359, %v359
    %v376 = vpack.c.bf16 %v360, %v360
    %v377 = vpack.c.bf16 %v361, %v361
    %v378 = vpack.c.bf16 %v362, %v362
    %v379 = vpack.c.bf16 %v363, %v363
    %v380 = vpack.c.bf16 %v364, %v364
    %v381 = vpack.c.bf16 %v365, %v365
    %v382 = vpack.c.bf16 %v366, %v366
    %v383 = vpack.c.bf16 %v367, %v367
    %v384 = vpack.c.bf16 %v368, %v368
    %v385 = vpack.c.bf16 %v369, %v369
    %v386 = vpack.c.bf16 %v370, %v370
    %v387 = vpack.c.bf16 %v371, %v371
    %v388 = vpack.c.bf16 %v372, %v372
    %v389 = vpack.c.bf16 %v373, %v373
    %v390 = vpack.c.bf16 %v374, %v374
    %v391 = vld [vmem:[#allocation5] sm:$0xf]
    %v392 = vld [vmem:[#allocation5 + $0x4] sm:$0xf]
    %v393 = vld [vmem:[#allocation5 + $0x8] sm:$0xf]
    %v394 = vld [vmem:[#allocation5 + $0xc] sm:$0xf]
    %v395 = vld [vmem:[#allocation5 + $0x10] sm:$0xf]
    %v396 = vld [vmem:[#allocation5 + $0x14] sm:$0xf]
    %v397 = vld [vmem:[#allocation5 + $0x18] sm:$0xf]
    %v398 = vld [vmem:[#allocation5 + $0x1c] sm:$0xf]
    %v399 = vld [vmem:[#allocation5 + $0x20] sm:$0xf]
    %v400 = vld [vmem:[#allocation5 + $0x24] sm:$0xf]
    %v401 = vld [vmem:[#allocation5 + $0x28] sm:$0xf]
    %v402 = vld [vmem:[#allocation5 + $0x2c] sm:$0xf]
    %v403 = vld [vmem:[#allocation5 + $0x30] sm:$0xf]
    %v404 = vld [vmem:[#allocation5 + $0x34] sm:$0xf]
    %v405 = vld [vmem:[#allocation5 + $0x38] sm:$0xf]
    %v406 = vld [vmem:[#allocation5 + $0x3c] sm:$0xf]
    %v407 = vld [vmem:[#allocation7] sm:$0xf]
    %v408 = vld [vmem:[#allocation7 + $0x4] sm:$0xf]
    %v409 = vld [vmem:[#allocation7 + $0x8] sm:$0xf]
    %v410 = vld [vmem:[#allocation7 + $0xc] sm:$0xf]
    %v411 = vld [vmem:[#allocation7 + $0x10] sm:$0xf]
    %v412 = vld [vmem:[#allocation7 + $0x14] sm:$0xf]
    %v413 = vld [vmem:[#allocation7 + $0x18] sm:$0xf]
    %v414 = vld [vmem:[#allocation7 + $0x1c] sm:$0xf]
    %v415 = vld [vmem:[#allocation7 + $0x20] sm:$0xf]
    %v416 = vld [vmem:[#allocation7 + $0x24] sm:$0xf]
    %v417 = vld [vmem:[#allocation7 + $0x28] sm:$0xf]
    %v418 = vld [vmem:[#allocation7 + $0x2c] sm:$0xf]
    %v419 = vld [vmem:[#allocation7 + $0x30] sm:$0xf]
    %v420 = vld [vmem:[#allocation7 + $0x34] sm:$0xf]
    %v421 = vld [vmem:[#allocation7 + $0x38] sm:$0xf]
    %v422 = vld [vmem:[#allocation7 + $0x3c] sm:$0xf]
    %v439 = vunpack.c.l.b16 %v375
    %v440 = vunpack.c.l.b16 %v376
    %v441 = vunpack.c.l.b16 %v377
    %v442 = vunpack.c.l.b16 %v378
    %v443 = vunpack.c.l.b16 %v379
    %v444 = vunpack.c.l.b16 %v380
    %v445 = vunpack.c.l.b16 %v381
    %v446 = vunpack.c.l.b16 %v382
    %v447 = vunpack.c.l.b16 %v383
    %v448 = vunpack.c.l.b16 %v384
    %v449 = vunpack.c.l.b16 %v385
    %v450 = vunpack.c.l.b16 %v386
    %v451 = vunpack.c.l.b16 %v387
    %v452 = vunpack.c.l.b16 %v388
    %v453 = vunpack.c.l.b16 %v389
    %v454 = vunpack.c.l.b16 %v390
    %v455 = vpack.c.b16 %v440, %v439
    %v456 = vpack.c.b16 %v442, %v441
    %v457 = vpack.c.b16 %v444, %v443
    %v458 = vpack.c.b16 %v446, %v445
    %v459 = vpack.c.b16 %v448, %v447
    %v460 = vpack.c.b16 %v450, %v449
    %v461 = vpack.c.b16 %v452, %v451
    %v462 = vpack.c.b16 %v454, %v453
    %v487 = vunpack.c.l.b16 %v407
    %v488 = vunpack.c.l.b16 %v408
    %v489 = vunpack.c.l.b16 %v409
    %v490 = vunpack.c.l.b16 %v410
    %v491 = vunpack.c.l.b16 %v411
    %v492 = vunpack.c.l.b16 %v412
    %v493 = vunpack.c.l.b16 %v413
    %v494 = vunpack.c.l.b16 %v414
    %v495 = vunpack.c.l.b16 %v415
    %v496 = vunpack.c.l.b16 %v416
    %v497 = vunpack.c.l.b16 %v417
    %v498 = vunpack.c.l.b16 %v418
    %v499 = vunpack.c.l.b16 %v419
    %v500 = vunpack.c.l.b16 %v420
    %v501 = vunpack.c.l.b16 %v421
    %v502 = vunpack.c.l.b16 %v422
    %v503 = vpack.c.b16 %v488, %v487
    %v504 = vpack.c.b16 %v490, %v489
    %v505 = vpack.c.b16 %v492, %v491
    %v506 = vpack.c.b16 %v494, %v493
    %v507 = vpack.c.b16 %v496, %v495
    %v508 = vpack.c.b16 %v498, %v497
    %v509 = vpack.c.b16 %v500, %v499
    %v510 = vpack.c.b16 %v502, %v501
    %519 = vmatprep.subr.bf16.mxu0 0
    %520 = vmatpush1.bf16.msra.mxu0 %v503
    %521 = vmatprep.subr.bf16.mxu0 0
    %522 = vmatpush1.bf16.msra.mxu0 %v504
    %523 = vmatprep.subr.bf16.mxu0 0
    %524 = vmatpush1.bf16.msra.mxu0 %v505
    %525 = vmatprep.subr.bf16.mxu0 0
    %526 = vmatpush1.bf16.msra.mxu0 %v506
    %527 = vmatprep.subr.bf16.mxu0 0
    %528 = vmatpush1.bf16.msra.mxu0 %v507
    %529 = vmatprep.subr.bf16.mxu0 0
    %530 = vmatpush1.bf16.msra.mxu0 %v508
    %531 = vmatprep.subr.bf16.mxu0 0
    %532 = vmatpush1.bf16.msra.mxu0 %v509
    %533 = vmatprep.subr.bf16.mxu0 0
    %534 = vmatpush1.bf16.msra.mxu0 %v510
    %535 = vmatprep.subr.bf16.mxu0 0
    %536 = vmatpush1.bf16.msra.mxu0 0
    %537 = vmatprep.subr.bf16.mxu0 0
    %538 = vmatpush1.bf16.msra.mxu0 0
    %539 = vmatprep.subr.bf16.mxu0 0
    %540 = vmatpush1.bf16.msra.mxu0 0
    %541 = vmatprep.subr.bf16.mxu0 0
    %542 = vmatpush1.bf16.msra.mxu0 0
    %543 = vmatprep.subr.bf16.mxu0 0
    %544 = vmatpush1.bf16.msra.mxu0 0
    %545 = vmatprep.subr.bf16.mxu0 0
    %546 = vmatpush1.bf16.msra.mxu0 0
    %547 = vmatprep.subr.bf16.mxu0 0
    %548 = vmatpush1.bf16.msra.mxu0 0
    %549 = vmatprep.subr.bf16.mxu0 0
    %550 = vmatpush1.bf16.msra.mxu0 0
    %551 = vmatprep.mubr.bf16.mxu0 0
    %552 = vmatmul.mubr.bf16.gmra.mrb[0].mxu0 %v455
    %v553 = vpop.f32.mrb[0].mxu0
    %v554 = vadd.f32 0.0, %v553
    %v555 = vpop.f32.mrb[0].mxu0
    %v556 = vpop.f32.mrb[0].mxu0
    %v557 = vadd.f32 0.0, %v556
    %v558 = vpop.f32.mrb[0].mxu0
    %559 = vmatprep.mubr.bf16.mxu0 0
    %560 = vmatmul.mubr.bf16.gmra.mrb[0].mxu0 %v456
    %v561 = vpop.f32.mrb[0].mxu0
    %v562 = vadd.f32 0.0, %v561
    %v563 = vpop.f32.mrb[0].mxu0
    %v564 = vpop.f32.mrb[0].mxu0
    %v565 = vadd.f32 0.0, %v564
    %v566 = vpop.f32.mrb[0].mxu0
    %567 = vmatprep.mubr.bf16.mxu0 0
    %568 = vmatmul.mubr.bf16.gmra.mrb[0].mxu0 %v457
    %v569 = vpop.f32.mrb[0].mxu0
    %v570 = vadd.f32 0.0, %v569
    %v571 = vpop.f32.mrb[0].mxu0
    %v572 = vpop.f32.mrb[0].mxu0
    %v573 = vadd.f32 0.0, %v572
    %v574 = vpop.f32.mrb[0].mxu0
    %575 = vmatprep.mubr.bf16.mxu0 0
    %576 = vmatmul.mubr.bf16.gmra.mrb[0].mxu0 %v458
    %v577 = vpop.f32.mrb[0].mxu0
    %v578 = vadd.f32 0.0, %v577
    %v579 = vpop.f32.mrb[0].mxu0
    %v580 = vpop.f32.mrb[0].mxu0
    %v581 = vadd.f32 0.0, %v580
    %v582 = vpop.f32.mrb[0].mxu0
    %583 = vmatprep.mubr.bf16.mxu0 0
    %584 = vmatmul.mubr.bf16.gmra.mrb[0].mxu0 %v459
    %v585 = vpop.f32.mrb[0].mxu0
    %v586 = vadd.f32 0.0, %v585
    %v587 = vpop.f32.mrb[0].mxu0
    %v588 = vpop.f32.mrb[0].mxu0
    %v589 = vadd.f32 0.0, %v588
    %v590 = vpop.f32.mrb[0].mxu0
    %591 = vmatprep.mubr.bf16.mxu0 0
    %592 = vmatmul.mubr.bf16.gmra.mrb[0].mxu0 %v460
    %v593 = vpop.f32.mrb[0].mxu0
    %v594 = vadd.f32 0.0, %v593
    %v595 = vpop.f32.mrb[0].mxu0
    %v596 = vpop.f32.mrb[0].mxu0
    %v597 = vadd.f32 0.0, %v596
    %v598 = vpop.f32.mrb[0].mxu0
    %599 = vmatprep.mubr.bf16.mxu0 0
    %600 = vmatmul.mubr.bf16.gmra.mrb[0].mxu0 %v461
    %v601 = vpop.f32.mrb[0].mxu0
    %v602 = vadd.f32 0.0, %v601
    %v603 = vpop.f32.mrb[0].mxu0
    %v604 = vpop.f32.mrb[0].mxu0
    %v605 = vadd.f32 0.0, %v604
    %v606 = vpop.f32.mrb[0].mxu0
    %607 = vmatprep.mubr.bf16.mxu0 0
    %608 = vmatmul.mubr.bf16.gmra.mrb[0].mxu0 %v462
    %v609 = vpop.f32.mrb[0].mxu0
    %v610 = vadd.f32 0.0, %v609
    %v611 = vpop.f32.mrb[0].mxu0
    %v612 = vpop.f32.mrb[0].mxu0
    %v613 = vadd.f32 0.0, %v612
    %v614 = vpop.f32.mrb[0].mxu0
    %615 = vdwg.mxu0
    %v632 = vunpack.c.l.b16 %v247
    %v633 = vunpack.c.l.b16 %v248
    %v634 = vunpack.c.l.b16 %v249
    %v635 = vunpack.c.l.b16 %v250
    %v636 = vunpack.c.l.b16 %v251
    %v637 = vunpack.c.l.b16 %v252
    %v638 = vunpack.c.l.b16 %v253
    %v639 = vunpack.c.l.b16 %v254
    %v640 = vunpack.c.l.b16 %v255
    %v641 = vunpack.c.l.b16 %v256
    %v642 = vunpack.c.l.b16 %v257
    %v643 = vunpack.c.l.b16 %v258
    %v644 = vunpack.c.l.b16 %v259
    %v645 = vunpack.c.l.b16 %v260
    %v646 = vunpack.c.l.b16 %v261
    %v647 = vunpack.c.l.b16 %v262
    %v648 = vpack.c.b16 %v633, %v632
    %v649 = vpack.c.b16 %v635, %v634
    %v650 = vpack.c.b16 %v637, %v636
    %v651 = vpack.c.b16 %v639, %v638
    %v652 = vpack.c.b16 %v641, %v640
    %v653 = vpack.c.b16 %v643, %v642
    %v654 = vpack.c.b16 %v645, %v644
    %v655 = vpack.c.b16 %v647, %v646
    %v680 = vunpack.c.l.b16 %v391
    %v681 = vunpack.c.l.b16 %v392
    %v682 = vunpack.c.l.b16 %v393
    %v683 = vunpack.c.l.b16 %v394
    %v684 = vunpack.c.l.b16 %v395
    %v685 = vunpack.c.l.b16 %v396
    %v686 = vunpack.c.l.b16 %v397
    %v687 = vunpack.c.l.b16 %v398
    %v688 = vunpack.c.l.b16 %v399
    %v689 = vunpack.c.l.b16 %v400
    %v690 = vunpack.c.l.b16 %v401
    %v691 = vunpack.c.l.b16 %v402
    %v692 = vunpack.c.l.b16 %v403
    %v693 = vunpack.c.l.b16 %v404
    %v694 = vunpack.c.l.b16 %v405
    %v695 = vunpack.c.l.b16 %v406
    %v696 = vpack.c.b16 %v681, %v680
    %v697 = vpack.c.b16 %v683, %v682
    %v698 = vpack.c.b16 %v685, %v684
    %v699 = vpack.c.b16 %v687, %v686
    %v700 = vpack.c.b16 %v689, %v688
    %v701 = vpack.c.b16 %v691, %v690
    %v702 = vpack.c.b16 %v693, %v692
    %v703 = vpack.c.b16 %v695, %v694
    %712 = vmatprep.subr.bf16.mxu0 0
    %713 = vmatpush1.bf16.msra.mxu0 %v696
    %714 = vmatprep.subr.bf16.mxu0 0
    %715 = vmatpush1.bf16.msra.mxu0 %v697
    %716 = vmatprep.subr.bf16.mxu0 0
    %717 = vmatpush1.bf16.msra.mxu0 %v698
    %718 = vmatprep.subr.bf16.mxu0 0
    %719 = vmatpush1.bf16.msra.mxu0 %v699
    %720 = vmatprep.subr.bf16.mxu0 0
    %721 = vmatpush1.bf16.msra.mxu0 %v700
    %722 = vmatprep.subr.bf16.mxu0 0
    %723 = vmatpush1.bf16.msra.mxu0 %v701
    %724 = vmatprep.subr.bf16.mxu0 0
    %725 = vmatpush1.bf16.msra.mxu0 %v702
    %726 = vmatprep.subr.bf16.mxu0 0
    %727 = vmatpush1.bf16.msra.mxu0 %v703
    %728 = vmatprep.subr.bf16.mxu0 0
    %729 = vmatpush1.bf16.msra.mxu0 0
    %730 = vmatprep.subr.bf16.mxu0 0
    %731 = vmatpush1.bf16.msra.mxu0 0
    %732 = vmatprep.subr.bf16.mxu0 0
    %733 = vmatpush1.bf16.msra.mxu0 0
    %734 = vmatprep.subr.bf16.mxu0 0
    %735 = vmatpush1.bf16.msra.mxu0 0
    %736 = vmatprep.subr.bf16.mxu0 0
    %737 = vmatpush1.bf16.msra.mxu0 0
    %738 = vmatprep.subr.bf16.mxu0 0
    %739 = vmatpush1.bf16.msra.mxu0 0
    %740 = vmatprep.subr.bf16.mxu0 0
    %741 = vmatpush1.bf16.msra.mxu0 0
    %742 = vmatprep.subr.bf16.mxu0 0
    %743 = vmatpush1.bf16.msra.mxu0 0
    %744 = vmatprep.mubr.bf16.mxu0 0
    %745 = vmatmul.mubr.bf16.gmra.mrb[0].mxu0 %v648
    %v746 = vpop.f32.mrb[0].mxu0
    %v747 = vadd.f32 %v554, %v746
    %v748 = vpop.f32.mrb[0].mxu0
    %v749 = vpop.f32.mrb[0].mxu0
    %v750 = vadd.f32 %v557, %v749
    %v751 = vpop.f32.mrb[0].mxu0
    %752 = vmatprep.mubr.bf16.mxu0 0
    %753 = vmatmul.mubr.bf16.gmra.mrb[0].mxu0 %v649
    %v754 = vpop.f32.mrb[0].mxu0
    %v755 = vadd.f32 %v562, %v754
    %v756 = vpop.f32.mrb[0].mxu0
    %v757 = vpop.f32.mrb[0].mxu0
    %v758 = vadd.f32 %v565, %v757
    %v759 = vpop.f32.mrb[0].mxu0
    %760 = vmatprep.mubr.bf16.mxu0 0
    %761 = vmatmul.mubr.bf16.gmra.mrb[0].mxu0 %v650
    %v762 = vpop.f32.mrb[0].mxu0
    %v763 = vadd.f32 %v570, %v762
    %v764 = vpop.f32.mrb[0].mxu0
    %v765 = vpop.f32.mrb[0].mxu0
    %v766 = vadd.f32 %v573, %v765
    %v767 = vpop.f32.mrb[0].mxu0
    %768 = vmatprep.mubr.bf16.mxu0 0
    %769 = vmatmul.mubr.bf16.gmra.mrb[0].mxu0 %v651
    %v770 = vpop.f32.mrb[0].mxu0
    %v771 = vadd.f32 %v578, %v770
    %v772 = vpop.f32.mrb[0].mxu0
    %v773 = vpop.f32.mrb[0].mxu0
    %v774 = vadd.f32 %v581, %v773
    %v775 = vpop.f32.mrb[0].mxu0
    %776 = vmatprep.mubr.bf16.mxu0 0
    %777 = vmatmul.mubr.bf16.gmra.mrb[0].mxu0 %v652
    %v778 = vpop.f32.mrb[0].mxu0
    %v779 = vadd.f32 %v586, %v778
    %v780 = vpop.f32.mrb[0].mxu0
    %v781 = vpop.f32.mrb[0].mxu0
    %v782 = vadd.f32 %v589, %v781
    %v783 = vpop.f32.mrb[0].mxu0
    %784 = vmatprep.mubr.bf16.mxu0 0
    %785 = vmatmul.mubr.bf16.gmra.mrb[0].mxu0 %v653
    %v786 = vpop.f32.mrb[0].mxu0
    %v787 = vadd.f32 %v594, %v786
    %v788 = vpop.f32.mrb[0].mxu0
    %v789 = vpop.f32.mrb[0].mxu0
    %v790 = vadd.f32 %v597, %v789
    %v791 = vpop.f32.mrb[0].mxu0
    %792 = vmatprep.mubr.bf16.mxu0 0
    %793 = vmatmul.mubr.bf16.gmra.mrb[0].mxu0 %v654
    %v794 = vpop.f32.mrb[0].mxu0
    %v795 = vadd.f32 %v602, %v794
    %v796 = vpop.f32.mrb[0].mxu0
    %v797 = vpop.f32.mrb[0].mxu0
    %v798 = vadd.f32 %v605, %v797
    %v799 = vpop.f32.mrb[0].mxu0
    %800 = vmatprep.mubr.bf16.mxu0 0
    %801 = vmatmul.mubr.bf16.gmra.mrb[0].mxu0 %v655
    %v802 = vpop.f32.mrb[0].mxu0
    %v803 = vadd.f32 %v610, %v802
    %v804 = vpop.f32.mrb[0].mxu0
    %v805 = vpop.f32.mrb[0].mxu0
    %v806 = vadd.f32 %v613, %v805
    %v807 = vpop.f32.mrb[0].mxu0
    %808 = vdwg.mxu0
    %v809 = vld [vmem:[%s3] sm:$0x1]
    %v811 = vlaneseq
    %v812 = vshrl.u32 %v811, 7
    %v813 = vsub.s32 0, %v812
    %v814 = vrot.slane %v809, %v813
    %v816 = vadd.f32 %v747, %v814
    %v817 = vadd.f32 %v750, %v814
    %v818 = vadd.f32 %v755, %v814
    %v819 = vadd.f32 %v758, %v814
    %v820 = vadd.f32 %v763, %v814
    %v821 = vadd.f32 %v766, %v814
    %v822 = vadd.f32 %v771, %v814
    %v823 = vadd.f32 %v774, %v814
    %v824 = vadd.f32 %v779, %v814
    %v825 = vadd.f32 %v782, %v814
    %v826 = vadd.f32 %v787, %v814
    %v827 = vadd.f32 %v790, %v814
    %v828 = vadd.f32 %v795, %v814
    %v829 = vadd.f32 %v798, %v814
    %v830 = vadd.f32 %v803, %v814
    %v831 = vadd.f32 %v806, %v814
    %v832 = vmax.f32 %v816, 0.0
    %v833 = vmax.f32 %v817, 0.0
    %v834 = vmax.f32 %v818, 0.0
    %v835 = vmax.f32 %v819, 0.0
    %v836 = vmax.f32 %v820, 0.0
    %v837 = vmax.f32 %v821, 0.0
    %v838 = vmax.f32 %v822, 0.0
    %v839 = vmax.f32 %v823, 0.0
    %v840 = vmax.f32 %v824, 0.0
    %v841 = vmax.f32 %v825, 0.0
    %v842 = vmax.f32 %v826, 0.0
    %v843 = vmax.f32 %v827, 0.0
    %v844 = vmax.f32 %v828, 0.0
    %v845 = vmax.f32 %v829, 0.0
    %v846 = vmax.f32 %v830, 0.0
    %v847 = vmax.f32 %v831, 0.0
    %v848 = vlaneseq
    %v849 = vshrl.u32 %v848, 7
    %vm850 = vcmp.lt.s32.totalorder %v849, 7
    %v851 = vsel %vm850, 1, 0
    %vm852 = vcmp.eq.s32.totalorder %v851, 1
    %v853 = vsel %vm852, %v832, 0.0
    %v854 = vsel %vm852, %v833, 0.0
    %v855 = vsel %vm852, %v834, 0.0
    %v856 = vsel %vm852, %v835, 0.0
    %v857 = vsel %vm852, %v836, 0.0
    %v858 = vsel %vm852, %v837, 0.0
    %v859 = vsel %vm852, %v838, 0.0
    %v860 = vsel %vm852, %v839, 0.0
    %v861 = vsel %vm852, %v840, 0.0
    %v862 = vsel %vm852, %v841, 0.0
    %v863 = vsel %vm852, %v842, 0.0
    %v864 = vsel %vm852, %v843, 0.0
    %v865 = vsel %vm852, %v844, 0.0
    %v866 = vsel %vm852, %v845, 0.0
    %v867 = vsel %vm852, %v846, 0.0
    %v868 = vsel %vm852, %v847, 0.0
    %v869 = vrot.slane %v853, 4
    %v870 = vmax.f32 %v853, %v869
    %v871 = vrot.slane %v870, 2
    %v872 = vmax.f32 %v870, %v871
    %v873 = vrot.slane %v872, 1
    %v874 = vmax.f32 %v872, %v873
    %v875 = vrot.slane %v854, 4
    %v876 = vmax.f32 %v854, %v875
    %v877 = vrot.slane %v876, 2
    %v878 = vmax.f32 %v876, %v877
    %v879 = vrot.slane %v878, 1
    %v880 = vmax.f32 %v878, %v879
    %v881 = vrot.slane %v855, 4
    %v882 = vmax.f32 %v855, %v881
    %v883 = vrot.slane %v882, 2
    %v884 = vmax.f32 %v882, %v883
    %v885 = vrot.slane %v884, 1
    %v886 = vmax.f32 %v884, %v885
    %v887 = vrot.slane %v856, 4
    %v888 = vmax.f32 %v856, %v887
    %v889 = vrot.slane %v888, 2
    %v890 = vmax.f32 %v888, %v889
    %v891 = vrot.slane %v890, 1
    %v892 = vmax.f32 %v890, %v891
    %v893 = vrot.slane %v857, 4
    %v894 = vmax.f32 %v857, %v893
    %v895 = vrot.slane %v894, 2
    %v896 = vmax.f32 %v894, %v895
    %v897 = vrot.slane %v896, 1
    %v898 = vmax.f32 %v896, %v897
    %v899 = vrot.slane %v858, 4
    %v900 = vmax.f32 %v858, %v899
    %v901 = vrot.slane %v900, 2
    %v902 = vmax.f32 %v900, %v901
    %v903 = vrot.slane %v902, 1
    %v904 = vmax.f32 %v902, %v903
    %v905 = vrot.slane %v859, 4
    %v906 = vmax.f32 %v859, %v905
    %v907 = vrot.slane %v906, 2
    %v908 = vmax.f32 %v906, %v907
    %v909 = vrot.slane %v908, 1
    %v910 = vmax.f32 %v908, %v909
    %v911 = vrot.slane %v860, 4
    %v912 = vmax.f32 %v860, %v911
    %v913 = vrot.slane %v912, 2
    %v914 = vmax.f32 %v912, %v913
    %v915 = vrot.slane %v914, 1
    %v916 = vmax.f32 %v914, %v915
    %v917 = vrot.slane %v861, 4
    %v918 = vmax.f32 %v861, %v917
    %v919 = vrot.slane %v918, 2
    %v920 = vmax.f32 %v918, %v919
    %v921 = vrot.slane %v920, 1
    %v922 = vmax.f32 %v920, %v921
    %v923 = vrot.slane %v862, 4
    %v924 = vmax.f32 %v862, %v923
    %v925 = vrot.slane %v924, 2
    %v926 = vmax.f32 %v924, %v925
    %v927 = vrot.slane %v926, 1
    %v928 = vmax.f32 %v926, %v927
    %v929 = vrot.slane %v863, 4
    %v930 = vmax.f32 %v863, %v929
    %v931 = vrot.slane %v930, 2
    %v932 = vmax.f32 %v930, %v931
    %v933 = vrot.slane %v932, 1
    %v934 = vmax.f32 %v932, %v933
    %v935 = vrot.slane %v864, 4
    %v936 = vmax.f32 %v864, %v935
    %v937 = vrot.slane %v936, 2
    %v938 = vmax.f32 %v936, %v937
    %v939 = vrot.slane %v938, 1
    %v940 = vmax.f32 %v938, %v939
    %v941 = vrot.slane %v865, 4
    %v942 = vmax.f32 %v865, %v941
    %v943 = vrot.slane %v942, 2
    %v944 = vmax.f32 %v942, %v943
    %v945 = vrot.slane %v944, 1
    %v946 = vmax.f32 %v944, %v945
    %v947 = vrot.slane %v866, 4
    %v948 = vmax.f32 %v866, %v947
    %v949 = vrot.slane %v948, 2
    %v950 = vmax.f32 %v948, %v949
    %v951 = vrot.slane %v950, 1
    %v952 = vmax.f32 %v950, %v951
    %v953 = vrot.slane %v867, 4
    %v954 = vmax.f32 %v867, %v953
    %v955 = vrot.slane %v954, 2
    %v956 = vmax.f32 %v954, %v955
    %v957 = vrot.slane %v956, 1
    %v958 = vmax.f32 %v956, %v957
    %v959 = vrot.slane %v868, 4
    %v960 = vmax.f32 %v868, %v959
    %v961 = vrot.slane %v960, 2
    %v962 = vmax.f32 %v960, %v961
    %v963 = vrot.slane %v962, 1
    %v964 = vmax.f32 %v962, %v963
    %v965 = vpack.c.bf16 %v874, %v874
    %v966 = vpack.c.bf16 %v880, %v880
    %v967 = vpack.c.bf16 %v886, %v886
    %v968 = vpack.c.bf16 %v892, %v892
    %v969 = vpack.c.bf16 %v898, %v898
    %v970 = vpack.c.bf16 %v904, %v904
    %v971 = vpack.c.bf16 %v910, %v910
    %v972 = vpack.c.bf16 %v916, %v916
    %v973 = vpack.c.bf16 %v922, %v922
    %v974 = vpack.c.bf16 %v928, %v928
    %v975 = vpack.c.bf16 %v934, %v934
    %v976 = vpack.c.bf16 %v940, %v940
    %v977 = vpack.c.bf16 %v946, %v946
    %v978 = vpack.c.bf16 %v952, %v952
    %v979 = vpack.c.bf16 %v958, %v958
    %v980 = vpack.c.bf16 %v964, %v964
    %v981 = vld [vmem:[#allocation8] sm:$0xff]
    %v982 = vld [vmem:[#allocation8 + $0x8] sm:$0xff]
    %v983 = vld [vmem:[#allocation8 + $0x10] sm:$0xff]
    %v984 = vld [vmem:[#allocation8 + $0x18] sm:$0xff]
    %v985 = vld [vmem:[#allocation8 + $0x20] sm:$0xff]
    %v986 = vld [vmem:[#allocation8 + $0x28] sm:$0xff]
    %v987 = vld [vmem:[#allocation8 + $0x30] sm:$0xff]
    %v988 = vld [vmem:[#allocation8 + $0x38] sm:$0xff]
    %v989 = vld [vmem:[#allocation8 + $0x40] sm:$0xff]
    %v990 = vld [vmem:[#allocation8 + $0x48] sm:$0xff]
    %v991 = vld [vmem:[#allocation8 + $0x50] sm:$0xff]
    %v992 = vld [vmem:[#allocation8 + $0x58] sm:$0xff]
    %v993 = vld [vmem:[#allocation8 + $0x60] sm:$0xff]
    %v994 = vld [vmem:[#allocation8 + $0x68] sm:$0xff]
    %v995 = vld [vmem:[#allocation8 + $0x70] sm:$0xff]
    %v996 = vld [vmem:[#allocation8 + $0x78] sm:$0xff]
    %v1013 = vunpack.c.l.b16 %v965
    %v1014 = vunpack.c.l.b16 %v966
    %v1015 = vunpack.c.l.b16 %v967
    %v1016 = vunpack.c.l.b16 %v968
    %v1017 = vunpack.c.l.b16 %v969
    %v1018 = vunpack.c.l.b16 %v970
    %v1019 = vunpack.c.l.b16 %v971
    %v1020 = vunpack.c.l.b16 %v972
    %v1021 = vunpack.c.l.b16 %v973
    %v1022 = vunpack.c.l.b16 %v974
    %v1023 = vunpack.c.l.b16 %v975
    %v1024 = vunpack.c.l.b16 %v976
    %v1025 = vunpack.c.l.b16 %v977
    %v1026 = vunpack.c.l.b16 %v978
    %v1027 = vunpack.c.l.b16 %v979
    %v1028 = vunpack.c.l.b16 %v980
    %vm1029 = vcmask 1041409
    %v1030 = vsel %vm1029, %v1014, %v1013
    %vm1031 = vcmask 1042434
    %v1032 = vsel %vm1031, %v1015, %v1030
    %vm1033 = vcmask 1043459
    %v1034 = vsel %vm1033, %v1016, %v1032
    %vm1035 = vcmask 1044484
    %v1036 = vsel %vm1035, %v1017, %v1034
    %vm1037 = vcmask 1045509
    %v1038 = vsel %vm1037, %v1018, %v1036
    %vm1039 = vcmask 1046534
    %v1040 = vsel %vm1039, %v1019, %v1038
    %vm1041 = vcmask 1047559
    %v1042 = vsel %vm1041, %v1020, %v1040
    %v1043 = vsel %vm1029, %v1022, %v1021
    %v1044 = vsel %vm1031, %v1023, %v1043
    %v1045 = vsel %vm1033, %v1024, %v1044
    %v1046 = vsel %vm1035, %v1025, %v1045
    %v1047 = vsel %vm1037, %v1026, %v1046
    %v1048 = vsel %vm1039, %v1027, %v1047
    %v1049 = vsel %vm1041, %v1028, %v1048
    %v1050 = vpack.c.b16 %v1049, %v1042
    %v1068 = vunpack.c.l.b16 %v981
    %v1069 = vunpack.c.h.b16 %v981
    %v1070 = vunpack.c.l.b16 %v982
    %v1071 = vunpack.c.h.b16 %v982
    %v1072 = vunpack.c.l.b16 %v983
    %v1073 = vunpack.c.h.b16 %v983
    %v1074 = vunpack.c.l.b16 %v984
    %v1075 = vunpack.c.h.b16 %v984
    %v1076 = vunpack.c.l.b16 %v985
    %v1077 = vunpack.c.h.b16 %v985
    %v1078 = vunpack.c.l.b16 %v986
    %v1079 = vunpack.c.h.b16 %v986
    %v1080 = vunpack.c.l.b16 %v987
    %v1081 = vunpack.c.h.b16 %v987
    %v1082 = vunpack.c.l.b16 %v988
    %v1083 = vunpack.c.h.b16 %v988
    %v1084 = vunpack.c.l.b16 %v989
    %v1085 = vunpack.c.h.b16 %v989
    %v1086 = vunpack.c.l.b16 %v990
    %v1087 = vunpack.c.h.b16 %v990
    %v1088 = vunpack.c.l.b16 %v991
    %v1089 = vunpack.c.h.b16 %v991
    %v1090 = vunpack.c.l.b16 %v992
    %v1091 = vunpack.c.h.b16 %v992
    %v1092 = vunpack.c.l.b16 %v993
    %v1093 = vunpack.c.h.b16 %v993
    %v1094 = vunpack.c.l.b16 %v994
    %v1095 = vunpack.c.h.b16 %v994
    %v1096 = vunpack.c.l.b16 %v995
    %v1097 = vunpack.c.h.b16 %v995
    %v1098 = vunpack.c.l.b16 %v996
    %v1099 = vunpack.c.h.b16 %v996
    %v1100 = vpack.c.b16 %v1070, %v1068
    %v1101 = vpack.c.b16 %v1071, %v1069
    %v1102 = vpack.c.b16 %v1074, %v1072
    %v1103 = vpack.c.b16 %v1075, %v1073
    %v1104 = vpack.c.b16 %v1078, %v1076
    %v1105 = vpack.c.b16 %v1079, %v1077
    %v1106 = vpack.c.b16 %v1082, %v1080
    %v1107 = vpack.c.b16 %v1083, %v1081
    %v1108 = vpack.c.b16 %v1086, %v1084
    %v1109 = vpack.c.b16 %v1087, %v1085
    %v1110 = vpack.c.b16 %v1090, %v1088
    %v1111 = vpack.c.b16 %v1091, %v1089
    %v1112 = vpack.c.b16 %v1094, %v1092
    %v1113 = vpack.c.b16 %v1095, %v1093
    %v1114 = vpack.c.b16 %v1098, %v1096
    %v1115 = vpack.c.b16 %v1099, %v1097
    %1132 = vmatprep.subr.bf16.mxu0 %v1101
    %1133 = vmatpush1.bf16.msra.mxu0 %v1100
    %1134 = vmatprep.subr.bf16.mxu0 %v1103
    %1135 = vmatpush1.bf16.msra.mxu0 %v1102
    %1136 = vmatprep.subr.bf16.mxu0 %v1105
    %1137 = vmatpush1.bf16.msra.mxu0 %v1104
    %1138 = vmatprep.subr.bf16.mxu0 %v1107
    %1139 = vmatpush1.bf16.msra.mxu0 %v1106
    %1140 = vmatprep.subr.bf16.mxu0 %v1109
    %1141 = vmatpush1.bf16.msra.mxu0 %v1108
    %1142 = vmatprep.subr.bf16.mxu0 %v1111
    %1143 = vmatpush1.bf16.msra.mxu0 %v1110
    %1144 = vmatprep.subr.bf16.mxu0 %v1113
    %1145 = vmatpush1.bf16.msra.mxu0 %v1112
    %1146 = vmatprep.subr.bf16.mxu0 %v1115
    %1147 = vmatpush1.bf16.msra.mxu0 %v1114
    %1148 = vmatprep.subr.bf16.mxu0 0
    %1149 = vmatpush1.bf16.msra.mxu0 0
    %1150 = vmatprep.subr.bf16.mxu0 0
    %1151 = vmatpush1.bf16.msra.mxu0 0
    %1152 = vmatprep.subr.bf16.mxu0 0
    %1153 = vmatpush1.bf16.msra.mxu0 0
    %1154 = vmatprep.subr.bf16.mxu0 0
    %1155 = vmatpush1.bf16.msra.mxu0 0
    %1156 = vmatprep.subr.bf16.mxu0 0
    %1157 = vmatpush1.bf16.msra.mxu0 0
    %1158 = vmatprep.subr.bf16.mxu0 0
    %1159 = vmatpush1.bf16.msra.mxu0 0
    %1160 = vmatprep.subr.bf16.mxu0 0
    %1161 = vmatpush1.bf16.msra.mxu0 0
    %1162 = vmatprep.subr.bf16.mxu0 0
    %1163 = vmatpush1.bf16.msra.mxu0 0
    %1164 = vmatprep.mubr.bf16.mxu0 0
    %1165 = vmatmul.mubr.bf16.gmra.mrb[0].mxu0 %v1050
    %v1166 = vpop.f32.mrb[0].mxu0
    %v1167 = vadd.f32 0.0, %v1166
    %v1168 = vpop.f32.mrb[0].mxu0
    %v1169 = vadd.f32 0.0, %v1168
    %v1170 = vpop.f32.mrb[0].mxu0
    %v1171 = vadd.f32 0.0, %v1170
    %v1172 = vpop.f32.mrb[0].mxu0
    %v1173 = vadd.f32 0.0, %v1172
    %1174 = vdwg.mxu0
    %v1175 = vld [vmem:[%s5] sm:$0x1]
    %v1177 = vlaneseq
    %v1178 = vshrl.u32 %v1177, 7
    %v1179 = vsub.s32 0, %v1178
    %v1180 = vrot.slane %v1175, %v1179
    %v1182 = vadd.f32 %v1167, %v1180
    %v1183 = vadd.f32 %v1171, %v1180
    %v1184 = vmax.f32 %v1182, 0.0
    %v1185 = vmax.f32 %v1183, 0.0
    %v1186 = vld [vmem:[%s6] sm:$0x1]
    %v1188 = vlaneseq
    %v1189 = vshrl.u32 %v1188, 7
    %v1190 = vsub.s32 0, %v1189
    %v1191 = vrot.slane %v1186, %v1190
    %v1193 = vadd.f32 %v1169, %v1191
    %v1194 = vadd.f32 %v1173, %v1191
    %v1195 = vxor.u32 %v1193, 2147483648
    %v1196 = vxor.u32 %v1194, 2147483648
    %v1197 = vmul.f32 %v1195, 1.442695
    %v1198 = vpow.pop %v1197
    %v1199 = vmul.f32 %v1196, 1.442695
    %v1200 = vpow.pop %v1199
    %v1201 = vadd.f32 %v1198, 1.0
    %v1202 = vadd.f32 %v1200, 1.0
    %v1203 = vrcp.pop %v1201
    %v1204 = vmul.f32 1.0, %v1203
    %v1205 = vrcp.pop %v1202
    %v1206 = vmul.f32 1.0, %v1205
    %v1223 = vsel %vm1029, %v880, %v874
    %v1224 = vsel %vm1031, %v886, %v1223
    %v1225 = vsel %vm1033, %v892, %v1224
    %v1226 = vsel %vm1035, %v898, %v1225
    %v1227 = vsel %vm1037, %v904, %v1226
    %v1228 = vsel %vm1039, %v910, %v1227
    %v1229 = vsel %vm1041, %v916, %v1228
    %v1230 = vsel %vm1029, %v928, %v922
    %v1231 = vsel %vm1031, %v934, %v1230
    %v1232 = vsel %vm1033, %v940, %v1231
    %v1233 = vsel %vm1035, %v946, %v1232
    %v1234 = vsel %vm1037, %v952, %v1233
    %v1235 = vsel %vm1039, %v958, %v1234
    %v1236 = vsel %vm1041, %v964, %v1235
    %v1239 = vsub.f32 %v1184, %v1229
    %v1240 = vsub.f32 %v1185, %v1236
    %v1241 = vmul.f32 %v1204, %v1239
    %v1242 = vmul.f32 %v1206, %v1240
    %v1245 = vrot.slane %v1241, 1
    %v1246 = vrot.slane %v1241, 2
    %v1247 = vrot.slane %v1241, 3
    %v1248 = vrot.slane %v1241, 4
    %v1249 = vrot.slane %v1241, 5
    %v1250 = vrot.slane %v1241, 6
    %v1251 = vrot.slane %v1241, 7
    %v1252 = vrot.slane %v1242, 1
    %v1253 = vrot.slane %v1242, 2
    %v1254 = vrot.slane %v1242, 3
    %v1255 = vrot.slane %v1242, 4
    %v1256 = vrot.slane %v1242, 5
    %v1257 = vrot.slane %v1242, 6
    %v1258 = vrot.slane %v1242, 7
    %v1275 = vadd.f32 %v874, %v1241
    %v1276 = vadd.f32 %v880, %v1245
    %v1277 = vadd.f32 %v886, %v1246
    %v1278 = vadd.f32 %v892, %v1247
    %v1279 = vadd.f32 %v898, %v1248
    %v1280 = vadd.f32 %v904, %v1249
    %v1281 = vadd.f32 %v910, %v1250
    %v1282 = vadd.f32 %v916, %v1251
    %v1283 = vadd.f32 %v922, %v1242
    %v1284 = vadd.f32 %v928, %v1252
    %v1285 = vadd.f32 %v934, %v1253
    %v1286 = vadd.f32 %v940, %v1254
    %v1287 = vadd.f32 %v946, %v1255
    %v1288 = vadd.f32 %v952, %v1256
    %v1289 = vadd.f32 %v958, %v1257
    %v1290 = vadd.f32 %v964, %v1258
    %v1307 = vrot.slane %v1276, 7
    %v1308 = vsel %vm1029, %v1307, %v1275
    %v1309 = vrot.slane %v1277, 6
    %v1310 = vsel %vm1031, %v1309, %v1308
    %v1311 = vrot.slane %v1278, 5
    %v1312 = vsel %vm1033, %v1311, %v1310
    %v1313 = vrot.slane %v1279, 4
    %v1314 = vsel %vm1035, %v1313, %v1312
    %v1315 = vrot.slane %v1280, 3
    %v1316 = vsel %vm1037, %v1315, %v1314
    %v1317 = vrot.slane %v1281, 2
    %v1318 = vsel %vm1039, %v1317, %v1316
    %v1319 = vrot.slane %v1282, 1
    %v1320 = vsel %vm1041, %v1319, %v1318
    %v1321 = vrot.slane %v1284, 7
    %v1322 = vsel %vm1029, %v1321, %v1283
    %v1323 = vrot.slane %v1285, 6
    %v1324 = vsel %vm1031, %v1323, %v1322
    %v1325 = vrot.slane %v1286, 5
    %v1326 = vsel %vm1033, %v1325, %v1324
    %v1327 = vrot.slane %v1287, 4
    %v1328 = vsel %vm1035, %v1327, %v1326
    %v1329 = vrot.slane %v1288, 3
    %v1330 = vsel %vm1037, %v1329, %v1328
    %v1331 = vrot.slane %v1289, 2
    %v1332 = vsel %vm1039, %v1331, %v1330
    %v1333 = vrot.slane %v1290, 1
    %v1334 = vsel %vm1041, %v1333, %v1332
    %1337 = vst [vmem:[#allocation10] sm:$0xff] %v1320
    %1338 = vst [vmem:[#allocation10 + $0x8] sm:$0xff] %v1334
    // Predicated region
    $region46: #{tpu_custom_call.1} parent=1 // pred_check
      _
    $region47: #{tpu_custom_call.1} parent=1 // pred_check_branch
      %1340 = sbr.rel (0) target = $region49
    $region48: #{tpu_custom_call.1} parent=1 // pred_region
      %s1342 = ssub.s32 256, 256
      %1343 = vsyncadd [#allocation4], %s1342
      %s1344 = sshll.u32 [#allocation10], 4
      %s1345 = int_to_ptr.vmem [resolvable:$true] %s1344
      %1350 = dma.vmem_to_hbm [thread:$0]  %s1345, 256, %s7, [#allocation4], 128, 128, 8
    $region49: #{tpu_custom_call.1} parent=1 // pred_fallthru
      _
    // Predicated region
    $region50: #{tpu_custom_call.1} parent=1 // pred_check
      _
    $region51: #{tpu_custom_call.1} parent=1 // pred_check_branch
      %1352 = sbr.rel (0) target = $region53
    $region52: #{tpu_custom_call.1} parent=1 // pred_region
      %1353 = dma.done [#allocation4], 256
    $region53: #{tpu_custom_call.1} parent=1 // pred_fallthru
      _
    %1354 = vsyncpa [#allocation3], 1
    %1355 = vsyncpa [#allocation6], 1
    %1356 = vsyncpa [#allocation9], 1
    %1357 = vsyncpa [#allocation4], 1

</llo_original>
